<compile_context>
chip_gen: v7x
topology: tpu7x:2x2x1
jax: 0.10.0
libtpu: 0.0.40
codegen_flags: <defaults>
</compile_context>

<pallas_src>
import jax
import jax.numpy as jnp
from jax.experimental import pallas as pl
from jax.experimental.pallas import tpu as pltpu

_LANES = 128
_VREG_ACC_BUDGET = 128 * 1024          # ~half of the 256 KiB vreg file
_BLOCK_BUDGET = 12 * 1024 * 1024       # double-buffered per-step block budget


def _spectral_mul_kernel(x_ref, w_ref, o_ref):
    """Complex channel-mixing contraction for one (S-tile, Cout-tile) block.

    x_ref : (2, Cin, B,   Ts)  [0]=real, [1]=imag of x_ft; Ts lane-dense
    w_ref : (2, Cin, Tco, Ts)  [0]=real, [1]=imag of weights2 tile
    o_ref : (2, B,   Tco, Ts)  [0]=real, [1]=imag of compl_mul2d(x_ft, w2)
    """
    c_in = x_ref.shape[1]
    b = x_ref.shape[2]
    t_co = w_ref.shape[2]
    t_s = x_ref.shape[3]

    # S-chunk size chosen so both f32 accumulators stay roughly within half of
    # the vreg file (avoids per-Cin accumulator spill/reload traffic at
    # realistic FNO sizes).  t_s is a power-of-two multiple of 128, so halving
    # keeps the chunk lane-dense.
    chunk = t_s
    while chunk > _LANES and 2 * b * t_co * chunk * 4 > _VREG_ACC_BUDGET:
        chunk //= 2

    for s0 in range(0, t_s, chunk):
        acc_r = jnp.zeros((b, t_co, chunk), jnp.float32)
        acc_i = jnp.zeros((b, t_co, chunk), jnp.float32)
        # Cin is small and static -> unrolled complex MAC on the VPU.
        # (Deliberately NOT jnp.dot: per-mode matmuls are (B x Cin)x(Cin x Tco),
        # far below MXU tile size — forcing the MXU would tank utilization.)
        for i in range(c_in):
            xr = x_ref[0, i, :, s0:s0 + chunk][:, None, :]   # (B, 1, chunk)
            xi = x_ref[1, i, :, s0:s0 + chunk][:, None, :]
            wr = w_ref[0, i, :, s0:s0 + chunk][None, :, :]   # (1, Tco, chunk)
            wi = w_ref[1, i, :, s0:s0 + chunk][None, :, :]
            # (a + ib)(c + id) = (ac - bd) + i(ad + bc)
            acc_r = acc_r + xr * wr - xi * wi
            acc_i = acc_i + xr * wi + xi * wr
        o_ref[0, :, :, s0:s0 + chunk] = acc_r
        o_ref[1, :, :, s0:s0 + chunk] = acc_i


def _db_block_bytes(b, c_in, t_co, t_s):
    """Double-buffered VMEM bytes for one grid step's blocks (f32)."""
    x_blk = 2 * c_in * b * t_s * 4
    w_blk = 2 * c_in * t_co * t_s * 4
    o_blk = 2 * b * t_co * t_s * 4
    return 2 * (x_blk + w_blk + o_blk)


def _choose_tiles(b, c_in, c_out, s):
    """Pick (t_cout, t_s, s_pad).

    Goals: lane-dense last dim (t_s multiple of 128), Cout tile a multiple of
    8 (or full Cout), >= 4 grid steps when possible (pipelining + v7x
    megacore), and the biggest double-buffered blocks that fit one
    generation-safe budget.
    """
    s128 = -(-s // _LANES) * _LANES

    # Cout tile candidates: sublane-dense multiples of 8 dividing c_out, plus
    # full c_out (always legal: block dim == full array dim).
    co_cands = [d for d in range(8, c_out, 8) if c_out % d == 0] + [c_out]

    # S tile candidates: power-of-two multiples of 128 (so the in-kernel
    # chunk halving stays lane-dense).
    s_cands = [t for t in (128, 256, 512, 1024, 2048) if t <= s128]

    best = None
    for t_s in s_cands:
        s_pad = -(-s // t_s) * t_s
        n_s = s_pad // t_s
        for t_co in co_cands:
            nbytes = _db_block_bytes(b, c_in, t_co, t_s)
            if nbytes > _BLOCK_BUDGET:
                continue
            steps = n_s * (c_out // t_co)
            waste = s_pad - s
            # Prefer >=4 grid steps, then the biggest blocks (amortize the
            # ~0.35us per-step overhead), then the least S padding.
            key = (min(steps, 4), nbytes, -waste, -steps)
            if best is None or key > best[0]:
                best = (key, t_co, t_s, s_pad)

    if best is None:
        # Nothing fits the budget even at minimum tiles; take the smallest
        # legal tiling and let vmem_limit_bytes grow to cover it.
        return co_cands[0], _LANES, s128
    return best[1], best[2], best[3]


def spectral_conv2d_fast(x, weights1, weights2, modes1, modes2):
    """Forward pass of SpectralConv2d_fast.

    x        : (B, Cin, H, W) float32   (NCHW, like PyTorch)
    weights1 : (2, Cin, Cout, modes1, modes2) float32  ([real, imag])
    weights2 : (2, Cin, Cout, modes1, modes2) float32
    returns  : (B, Cout, H, W) float32
    """
    B, Cin, H, W = x.shape
    Wf = W // 2 + 1
    Cout = weights2.shape[2]
    S = H * Wf

    # The reference torch einsum is only well-formed for these shapes; the
    # "weights1 is dead" optimization below relies on this assert.
    assert modes1 == H and modes2 == Wf, (
        "reference module requires modes1 == H and modes2 == W//2+1")

    # --- XLA glue: forward FFT (no Pallas FFT primitive) -------------------
    x_ft = jnp.fft.rfft2(x)                                   # (B,Cin,H,Wf) c64
    xr = jnp.real(x_ft).astype(jnp.float32)
    xi = jnp.imag(x_ft).astype(jnp.float32)

    # Pack real/imag + flatten (H, Wf) -> lane-dense S; Cin leading so the
    # kernel's per-i slices are simple static reads:  (2, Cin, B, S).
    xs = jnp.stack([xr, xi], axis=0)                          # (2,B,Cin,H,Wf)
    xs = jnp.transpose(xs, (0, 2, 1, 3, 4)).reshape(2, Cin, B, S)

    # NOTE: weights1 is intentionally NOT passed to the kernel.  With
    # modes1 == H, modes2 == Wf the second spectral write overwrites the
    # first completely, so the weights1 product is dead work (see header).
    w2 = weights2.astype(jnp.float32).reshape(2, Cin, Cout, S)

    t_co, t_s, s_pad = _choose_tiles(B, Cin, Cout, S)

    # Pad S up to a multiple of the S tile so every block is lane-dense and
    # stores are unmasked; padded lanes are zero and sliced off afterwards.
    if s_pad > S:
        pad = s_pad - S
        xs = jnp.pad(xs, ((0, 0), (0, 0), (0, 0), (0, pad)))
        w2 = jnp.pad(w2, ((0, 0), (0, 0), (0, 0), (0, pad)))

    n_s = s_pad // t_s
    n_co = Cout // t_co
    grid = (n_s, n_co)   # Cout innermost: x block is revisited (not re-DMA'd)
                         # across consecutive Cout steps of the same S tile.

    x_spec = pl.BlockSpec((2, Cin, B, t_s), lambda l, j: (0, 0, 0, l))
    w_spec = pl.BlockSpec((2, Cin, t_co, t_s), lambda l, j: (0, 0, j, l))
    o_spec = pl.BlockSpec((2, B, t_co, t_s), lambda l, j: (0, 0, j, l))

    # One per-generation number: VMEM limit derived from the actual blocks.
    vmem_limit = max(_db_block_bytes(B, Cin, t_co, t_s) + (8 << 20), 16 << 20)

    out_packed = pl.pallas_call(
        _spectral_mul_kernel,
        grid=grid,
        in_specs=[x_spec, w_spec],
        out_specs=o_spec,
        out_shape=jax.ShapeDtypeStruct((2, B, Cout, s_pad), jnp.float32),
        compiler_params=pltpu.CompilerParams(
            dimension_semantics=("parallel", "parallel"),
            vmem_limit_bytes=int(vmem_limit),
        ),
    )(xs, w2)

    out_packed = out_packed[..., :S]                          # drop S padding
    mul2 = (out_packed[0] + 1j * out_packed[1]).astype(jnp.complex64)
    mul2 = mul2.reshape(B, Cout, H, Wf)

    # out_ft assembly mirroring the torch index assignment that survives the
    # overwrite (the weights1 write is fully covered by this one).
    out_ft = jnp.zeros((B, Cout, H, Wf), jnp.complex64)
    out_ft = out_ft.at[:, :, H - modes1:, :modes2].set(mul2)

    # --- XLA glue: inverse FFT back to the spatial domain ------------------
    return jnp.fft.irfft2(out_ft, s=(H, W)).astype(jnp.float32)


if __name__ == "__main__":
    # Small shapes consistent with the module's constraints.
    B, Cin, Cout = 2, 4, 4
    H = W = 16
    modes1, modes2 = H, W // 2 + 1          # 16, 9

    key = jax.random.PRNGKey(0)
    kx, k1, k2 = jax.random.split(key, 3)

    x = jax.random.normal(kx, (B, Cin, H, W), dtype=jnp.float32)

    scale = 1.0 / (Cin * Cout)
    weights1 = scale * jax.random.uniform(
        k1, (2, Cin, Cout, modes1, modes2), dtype=jnp.float32)
    weights2 = scale * jax.random.uniform(
        k2, (2, Cin, Cout, modes1, modes2), dtype=jnp.float32)

    out = spectral_conv2d_fast(x, weights1, weights2, modes1, modes2)
    out = jax.block_until_ready(out)

    assert out.shape == (B, Cout, H, W)
    assert bool(jnp.all(jnp.isfinite(out)))

    # Pure-JAX reference (elementwise, no MXU) of the surviving forward path.
    x_ft_ref = jnp.fft.rfft2(x)
    w2c = (weights2[0] + 1j * weights2[1]).astype(jnp.complex64)
    mul2_ref = jnp.sum(x_ft_ref[:, :, None, :, :] * w2c[None, :, :, :, :],
                       axis=1)                                # (B,Cout,H,Wf)
    out_ref = jnp.fft.irfft2(mul2_ref, s=(H, W)).astype(jnp.float32)
    assert bool(jnp.allclose(out, out_ref, rtol=1e-3, atol=1e-4)), (
        float(jnp.max(jnp.abs(out - out_ref))))

    print("KERNEL_OK")
</pallas_src>

<mosaic_0001>
module attributes {stable_mosaic.version = 11 : i64} {
  func.func @_spectral_mul_kernel(%arg0: i32, %arg1: i32, %arg2: memref<2x4x2x128xf32, #tpu.memory_space<vmem>>, %arg3: memref<2x4x4x128xf32, #tpu.memory_space<vmem>>, %arg4: memref<2x2x4x128xf32, #tpu.memory_space<vmem>>) attributes {dimension_semantics = [#tpu.dimension_semantics<parallel>, #tpu.dimension_semantics<parallel>], iteration_bounds = array<i64: 2, 1>, scalar_prefetch = 0 : i64, scratch_operands = 0 : i64, tpu.core_type = #tpu.core_type<tc>, window_params = [{transform_indices = @transform_0, window_bounds = array<i64: 2, 4, 2, 128>}, {transform_indices = @transform_1, window_bounds = array<i64: 2, 4, 4, 128>}, {transform_indices = @transform_2, window_bounds = array<i64: 2, 2, 4, 128>}]} {
    %cst = arith.constant 0.000000e+00 : f32
    %0 = vector.broadcast %cst : f32 to vector<2x4x128xf32>
    %cst_0 = arith.constant 0.000000e+00 : f32
    %1 = vector.broadcast %cst_0 : f32 to vector<2x4x128xf32>
    %c0 = arith.constant 0 : index
    %c0_1 = arith.constant 0 : index
    %c0_2 = arith.constant 0 : index
    %c0_3 = arith.constant 0 : index
    %2 = vector.load %arg2[%c0, %c0_1, %c0_2, %c0_3] : memref<2x4x2x128xf32, #tpu.memory_space<vmem>>, vector<1x1x2x128xf32>
    %3 = vector.shape_cast %2 : vector<1x1x2x128xf32> to vector<2x128xf32>
    %4 = vector.shape_cast %3 : vector<2x128xf32> to vector<2x1x128xf32>
    %c1 = arith.constant 1 : index
    %c0_4 = arith.constant 0 : index
    %c0_5 = arith.constant 0 : index
    %c0_6 = arith.constant 0 : index
    %5 = vector.load %arg2[%c1, %c0_4, %c0_5, %c0_6] : memref<2x4x2x128xf32, #tpu.memory_space<vmem>>, vector<1x1x2x128xf32>
    %6 = vector.shape_cast %5 : vector<1x1x2x128xf32> to vector<2x128xf32>
    %7 = vector.shape_cast %6 : vector<2x128xf32> to vector<2x1x128xf32>
    %c0_7 = arith.constant 0 : index
    %c0_8 = arith.constant 0 : index
    %c0_9 = arith.constant 0 : index
    %c0_10 = arith.constant 0 : index
    %8 = vector.load %arg3[%c0_7, %c0_8, %c0_9, %c0_10] : memref<2x4x4x128xf32, #tpu.memory_space<vmem>>, vector<1x1x4x128xf32>
    %9 = vector.shape_cast %8 : vector<1x1x4x128xf32> to vector<4x128xf32>
    %10 = vector.shape_cast %9 : vector<4x128xf32> to vector<1x4x128xf32>
    %c1_11 = arith.constant 1 : index
    %c0_12 = arith.constant 0 : index
    %c0_13 = arith.constant 0 : index
    %c0_14 = arith.constant 0 : index
    %11 = vector.load %arg3[%c1_11, %c0_12, %c0_13, %c0_14] : memref<2x4x4x128xf32, #tpu.memory_space<vmem>>, vector<1x1x4x128xf32>
    %12 = vector.shape_cast %11 : vector<1x1x4x128xf32> to vector<4x128xf32>
    %13 = vector.shape_cast %12 : vector<4x128xf32> to vector<1x4x128xf32>
    %14 = vector.broadcast %4 : vector<2x1x128xf32> to vector<2x4x128xf32>
    %15 = vector.broadcast %10 : vector<1x4x128xf32> to vector<2x4x128xf32>
    %16 = arith.mulf %14, %15 : vector<2x4x128xf32>
    %17 = arith.addf %0, %16 : vector<2x4x128xf32>
    %18 = vector.broadcast %7 : vector<2x1x128xf32> to vector<2x4x128xf32>
    %19 = vector.broadcast %13 : vector<1x4x128xf32> to vector<2x4x128xf32>
    %20 = arith.mulf %18, %19 : vector<2x4x128xf32>
    %21 = arith.subf %17, %20 : vector<2x4x128xf32>
    %22 = vector.broadcast %4 : vector<2x1x128xf32> to vector<2x4x128xf32>
    %23 = vector.broadcast %13 : vector<1x4x128xf32> to vector<2x4x128xf32>
    %24 = arith.mulf %22, %23 : vector<2x4x128xf32>
    %25 = arith.addf %1, %24 : vector<2x4x128xf32>
    %26 = vector.broadcast %7 : vector<2x1x128xf32> to vector<2x4x128xf32>
    %27 = vector.broadcast %10 : vector<1x4x128xf32> to vector<2x4x128xf32>
    %28 = arith.mulf %26, %27 : vector<2x4x128xf32>
    %29 = arith.addf %25, %28 : vector<2x4x128xf32>
    %c0_15 = arith.constant 0 : index
    %c1_16 = arith.constant 1 : index
    %c0_17 = arith.constant 0 : index
    %c0_18 = arith.constant 0 : index
    %30 = vector.load %arg2[%c0_15, %c1_16, %c0_17, %c0_18] : memref<2x4x2x128xf32, #tpu.memory_space<vmem>>, vector<1x1x2x128xf32>
    %31 = vector.shape_cast %30 : vector<1x1x2x128xf32> to vector<2x128xf32>
    %32 = vector.shape_cast %31 : vector<2x128xf32> to vector<2x1x128xf32>
    %c1_19 = arith.constant 1 : index
    %c1_20 = arith.constant 1 : index
    %c0_21 = arith.constant 0 : index
    %c0_22 = arith.constant 0 : index
    %33 = vector.load %arg2[%c1_19, %c1_20, %c0_21, %c0_22] : memref<2x4x2x128xf32, #tpu.memory_space<vmem>>, vector<1x1x2x128xf32>
    %34 = vector.shape_cast %33 : vector<1x1x2x128xf32> to vector<2x128xf32>
    %35 = vector.shape_cast %34 : vector<2x128xf32> to vector<2x1x128xf32>
    %c0_23 = arith.constant 0 : index
    %c1_24 = arith.constant 1 : index
    %c0_25 = arith.constant 0 : index
    %c0_26 = arith.constant 0 : index
    %36 = vector.load %arg3[%c0_23, %c1_24, %c0_25, %c0_26] : memref<2x4x4x128xf32, #tpu.memory_space<vmem>>, vector<1x1x4x128xf32>
    %37 = vector.shape_cast %36 : vector<1x1x4x128xf32> to vector<4x128xf32>
    %38 = vector.shape_cast %37 : vector<4x128xf32> to vector<1x4x128xf32>
    %c1_27 = arith.constant 1 : index
    %c1_28 = arith.constant 1 : index
    %c0_29 = arith.constant 0 : index
    %c0_30 = arith.constant 0 : index
    %39 = vector.load %arg3[%c1_27, %c1_28, %c0_29, %c0_30] : memref<2x4x4x128xf32, #tpu.memory_space<vmem>>, vector<1x1x4x128xf32>
    %40 = vector.shape_cast %39 : vector<1x1x4x128xf32> to vector<4x128xf32>
    %41 = vector.shape_cast %40 : vector<4x128xf32> to vector<1x4x128xf32>
    %42 = vector.broadcast %32 : vector<2x1x128xf32> to vector<2x4x128xf32>
    %43 = vector.broadcast %38 : vector<1x4x128xf32> to vector<2x4x128xf32>
    %44 = arith.mulf %42, %43 : vector<2x4x128xf32>
    %45 = arith.addf %21, %44 : vector<2x4x128xf32>
    %46 = vector.broadcast %35 : vector<2x1x128xf32> to vector<2x4x128xf32>
    %47 = vector.broadcast %41 : vector<1x4x128xf32> to vector<2x4x128xf32>
    %48 = arith.mulf %46, %47 : vector<2x4x128xf32>
    %49 = arith.subf %45, %48 : vector<2x4x128xf32>
    %50 = vector.broadcast %32 : vector<2x1x128xf32> to vector<2x4x128xf32>
    %51 = vector.broadcast %41 : vector<1x4x128xf32> to vector<2x4x128xf32>
    %52 = arith.mulf %50, %51 : vector<2x4x128xf32>
    %53 = arith.addf %29, %52 : vector<2x4x128xf32>
    %54 = vector.broadcast %35 : vector<2x1x128xf32> to vector<2x4x128xf32>
    %55 = vector.broadcast %38 : vector<1x4x128xf32> to vector<2x4x128xf32>
    %56 = arith.mulf %54, %55 : vector<2x4x128xf32>
    %57 = arith.addf %53, %56 : vector<2x4x128xf32>
    %c0_31 = arith.constant 0 : index
    %c2 = arith.constant 2 : index
    %c0_32 = arith.constant 0 : index
    %c0_33 = arith.constant 0 : index
    %58 = vector.load %arg2[%c0_31, %c2, %c0_32, %c0_33] : memref<2x4x2x128xf32, #tpu.memory_space<vmem>>, vector<1x1x2x128xf32>
    %59 = vector.shape_cast %58 : vector<1x1x2x128xf32> to vector<2x128xf32>
    %60 = vector.shape_cast %59 : vector<2x128xf32> to vector<2x1x128xf32>
    %c1_34 = arith.constant 1 : index
    %c2_35 = arith.constant 2 : index
    %c0_36 = arith.constant 0 : index
    %c0_37 = arith.constant 0 : index
    %61 = vector.load %arg2[%c1_34, %c2_35, %c0_36, %c0_37] : memref<2x4x2x128xf32, #tpu.memory_space<vmem>>, vector<1x1x2x128xf32>
    %62 = vector.shape_cast %61 : vector<1x1x2x128xf32> to vector<2x128xf32>
    %63 = vector.shape_cast %62 : vector<2x128xf32> to vector<2x1x128xf32>
    %c0_38 = arith.constant 0 : index
    %c2_39 = arith.constant 2 : index
    %c0_40 = arith.constant 0 : index
    %c0_41 = arith.constant 0 : index
    %64 = vector.load %arg3[%c0_38, %c2_39, %c0_40, %c0_41] : memref<2x4x4x128xf32, #tpu.memory_space<vmem>>, vector<1x1x4x128xf32>
    %65 = vector.shape_cast %64 : vector<1x1x4x128xf32> to vector<4x128xf32>
    %66 = vector.shape_cast %65 : vector<4x128xf32> to vector<1x4x128xf32>
    %c1_42 = arith.constant 1 : index
    %c2_43 = arith.constant 2 : index
    %c0_44 = arith.constant 0 : index
    %c0_45 = arith.constant 0 : index
    %67 = vector.load %arg3[%c1_42, %c2_43, %c0_44, %c0_45] : memref<2x4x4x128xf32, #tpu.memory_space<vmem>>, vector<1x1x4x128xf32>
    %68 = vector.shape_cast %67 : vector<1x1x4x128xf32> to vector<4x128xf32>
    %69 = vector.shape_cast %68 : vector<4x128xf32> to vector<1x4x128xf32>
    %70 = vector.broadcast %60 : vector<2x1x128xf32> to vector<2x4x128xf32>
    %71 = vector.broadcast %66 : vector<1x4x128xf32> to vector<2x4x128xf32>
    %72 = arith.mulf %70, %71 : vector<2x4x128xf32>
    %73 = arith.addf %49, %72 : vector<2x4x128xf32>
    %74 = vector.broadcast %63 : vector<2x1x128xf32> to vector<2x4x128xf32>
    %75 = vector.broadcast %69 : vector<1x4x128xf32> to vector<2x4x128xf32>
    %76 = arith.mulf %74, %75 : vector<2x4x128xf32>
    %77 = arith.subf %73, %76 : vector<2x4x128xf32>
    %78 = vector.broadcast %60 : vector<2x1x128xf32> to vector<2x4x128xf32>
    %79 = vector.broadcast %69 : vector<1x4x128xf32> to vector<2x4x128xf32>
    %80 = arith.mulf %78, %79 : vector<2x4x128xf32>
    %81 = arith.addf %57, %80 : vector<2x4x128xf32>
    %82 = vector.broadcast %63 : vector<2x1x128xf32> to vector<2x4x128xf32>
    %83 = vector.broadcast %66 : vector<1x4x128xf32> to vector<2x4x128xf32>
    %84 = arith.mulf %82, %83 : vector<2x4x128xf32>
    %85 = arith.addf %81, %84 : vector<2x4x128xf32>
    %c0_46 = arith.constant 0 : index
    %c3 = arith.constant 3 : index
    %c0_47 = arith.constant 0 : index
    %c0_48 = arith.constant 0 : index
    %86 = vector.load %arg2[%c0_46, %c3, %c0_47, %c0_48] : memref<2x4x2x128xf32, #tpu.memory_space<vmem>>, vector<1x1x2x128xf32>
    %87 = vector.shape_cast %86 : vector<1x1x2x128xf32> to vector<2x128xf32>
    %88 = vector.shape_cast %87 : vector<2x128xf32> to vector<2x1x128xf32>
    %c1_49 = arith.constant 1 : index
    %c3_50 = arith.constant 3 : index
    %c0_51 = arith.constant 0 : index
    %c0_52 = arith.constant 0 : index
    %89 = vector.load %arg2[%c1_49, %c3_50, %c0_51, %c0_52] : memref<2x4x2x128xf32, #tpu.memory_space<vmem>>, vector<1x1x2x128xf32>
    %90 = vector.shape_cast %89 : vector<1x1x2x128xf32> to vector<2x128xf32>
    %91 = vector.shape_cast %90 : vector<2x128xf32> to vector<2x1x128xf32>
    %c0_53 = arith.constant 0 : index
    %c3_54 = arith.constant 3 : index
    %c0_55 = arith.constant 0 : index
    %c0_56 = arith.constant 0 : index
    %92 = vector.load %arg3[%c0_53, %c3_54, %c0_55, %c0_56] : memref<2x4x4x128xf32, #tpu.memory_space<vmem>>, vector<1x1x4x128xf32>
    %93 = vector.shape_cast %92 : vector<1x1x4x128xf32> to vector<4x128xf32>
    %94 = vector.shape_cast %93 : vector<4x128xf32> to vector<1x4x128xf32>
    %c1_57 = arith.constant 1 : index
    %c3_58 = arith.constant 3 : index
    %c0_59 = arith.constant 0 : index
    %c0_60 = arith.constant 0 : index
    %95 = vector.load %arg3[%c1_57, %c3_58, %c0_59, %c0_60] : memref<2x4x4x128xf32, #tpu.memory_space<vmem>>, vector<1x1x4x128xf32>
    %96 = vector.shape_cast %95 : vector<1x1x4x128xf32> to vector<4x128xf32>
    %97 = vector.shape_cast %96 : vector<4x128xf32> to vector<1x4x128xf32>
    %98 = vector.broadcast %88 : vector<2x1x128xf32> to vector<2x4x128xf32>
    %99 = vector.broadcast %94 : vector<1x4x128xf32> to vector<2x4x128xf32>
    %100 = arith.mulf %98, %99 : vector<2x4x128xf32>
    %101 = arith.addf %77, %100 : vector<2x4x128xf32>
    %102 = vector.broadcast %91 : vector<2x1x128xf32> to vector<2x4x128xf32>
    %103 = vector.broadcast %97 : vector<1x4x128xf32> to vector<2x4x128xf32>
    %104 = arith.mulf %102, %103 : vector<2x4x128xf32>
    %105 = arith.subf %101, %104 : vector<2x4x128xf32>
    %106 = vector.broadcast %88 : vector<2x1x128xf32> to vector<2x4x128xf32>
    %107 = vector.broadcast %97 : vector<1x4x128xf32> to vector<2x4x128xf32>
    %108 = arith.mulf %106, %107 : vector<2x4x128xf32>
    %109 = arith.addf %85, %108 : vector<2x4x128xf32>
    %110 = vector.broadcast %91 : vector<2x1x128xf32> to vector<2x4x128xf32>
    %111 = vector.broadcast %94 : vector<1x4x128xf32> to vector<2x4x128xf32>
    %112 = arith.mulf %110, %111 : vector<2x4x128xf32>
    %113 = arith.addf %109, %112 : vector<2x4x128xf32>
    %c0_61 = arith.constant 0 : index
    %c0_62 = arith.constant 0 : index
    %c0_63 = arith.constant 0 : index
    %c0_64 = arith.constant 0 : index
    %114 = vector.load %arg4[%c0_61, %c0_62, %c0_63, %c0_64] : memref<2x2x4x128xf32, #tpu.memory_space<vmem>>, vector<1x2x4x128xf32>
    %115 = vector.shape_cast %114 : vector<1x2x4x128xf32> to vector<2x4x128xf32>
    %116 = vector.shape_cast %105 : vector<2x4x128xf32> to vector<1x2x4x128xf32>
    tpu.vector_store %arg4[%c0_61, %c0_62, %c0_63, %c0_64], %116 {strides = array<i32>} : memref<2x2x4x128xf32, #tpu.memory_space<vmem>>, vector<1x2x4x128xf32>,
    %c1_65 = arith.constant 1 : index
    %c0_66 = arith.constant 0 : index
    %c0_67 = arith.constant 0 : index
    %c0_68 = arith.constant 0 : index
    %117 = vector.load %arg4[%c1_65, %c0_66, %c0_67, %c0_68] : memref<2x2x4x128xf32, #tpu.memory_space<vmem>>, vector<1x2x4x128xf32>
    %118 = vector.shape_cast %117 : vector<1x2x4x128xf32> to vector<2x4x128xf32>
    %119 = vector.shape_cast %113 : vector<2x4x128xf32> to vector<1x2x4x128xf32>
    tpu.vector_store %arg4[%c1_65, %c0_66, %c0_67, %c0_68], %119 {strides = array<i32>} : memref<2x2x4x128xf32, #tpu.memory_space<vmem>>, vector<1x2x4x128xf32>,
    return
  }
  func.func @transform_0(%arg0: i32, %arg1: i32) -> (i32, i32, i32, i32) {
    %c0_i32 = arith.constant 0 : i32
    %c0_i32_0 = arith.constant 0 : i32
    %c0_i32_1 = arith.constant 0 : i32
    %c0_i32_2 = arith.constant 0 : i32
    return %c0_i32, %c0_i32_0, %c0_i32_1, %arg0 : i32, i32, i32, i32
  }
  func.func @transform_1(%arg0: i32, %arg1: i32) -> (i32, i32, i32, i32) {
    %c0_i32 = arith.constant 0 : i32
    %c0_i32_0 = arith.constant 0 : i32
    %c0_i32_1 = arith.constant 0 : i32
    return %c0_i32, %c0_i32_0, %arg1, %arg0 : i32, i32, i32, i32
  }
  func.func @transform_2(%arg0: i32, %arg1: i32) -> (i32, i32, i32, i32) {
    %c0_i32 = arith.constant 0 : i32
    %c0_i32_0 = arith.constant 0 : i32
    %c0_i32_1 = arith.constant 0 : i32
    return %c0_i32, %c0_i32_0, %arg1, %arg0 : i32, i32, i32, i32
  }
}

</mosaic_0001>

<llo_original>
// kernel: tpu_custom_call.1
$region0: #{tpu_custom_call.1}
  #allocation0 [shape = 'u32[]', space=smem, size = 0x4, offset = 0x4, fixed_abs, tag = 'smem constant byte address 0x4 - core index']
  #allocation1 [shape = 'u32[144,128]{1,0:T(1,128)}', space=vmem, size = 0x12000, scoped, tag = 'internal scratch']
  %s0 = inlined_call_operand.hbm [shape: f32[2,4,2,256], index: 0, kind: input, shape index: {}]
  %s1 = inlined_call_operand.hbm [shape: f32[2,4,4,256], index: 1, kind: input, shape index: {}]
  %s2 = inlined_call_operand.hbm [shape: f32[2,2,4,256], index: 2, kind: output, shape index: {}]
  %s3 = sld [smem:[#allocation0]]
  $region49: #{tpu_custom_call.1} parent=0
    _
  %s5 = ssub.s32 1, %s3
  %s6 = scalar_select 0, %s5, %s3
  $region1: #{tpu_custom_call.1} parent=0
    #allocation2 [shape = 'u8[16384]{0}', space=vmem, size = 0x4000, scoped, tag = 'input window, operand 0']
    #allocation3 [shape = 's32[2]{0}', space=sflag, size = 0x8, scoped, tag = 'scoped memory for tpu_custom_call.1']
    #allocation4 [shape = 's32[2]{0}', space=sflag, size = 0x8, scoped, tag = 'scoped memory for tpu_custom_call.1']
    #allocation5 [shape = 'u8[32768]{0}', space=vmem, size = 0x8000, scoped, tag = 'input window, operand 1']
    #allocation6 [shape = 's32[2]{0}', space=sflag, size = 0x8, scoped, tag = 'scoped memory for tpu_custom_call.1']
    #allocation7 [shape = 'u8[16384]{0}', space=vmem, size = 0x4000, scoped, tag = 'output window, operand 0']
    %7 = vsyncpa [#allocation3], 0
    %s8 = scalar_lea.sflag [#allocation3], 1
    %9 = vsyncpa %s8, 0
    %10 = vsyncpa [#allocation6], 0
    %s11 = scalar_lea.sflag [#allocation6], 1
    %12 = vsyncpa %s11, 0
    %13 = vsyncpa [#allocation4], 0
    %s14 = scalar_lea.sflag [#allocation4], 1
    %15 = vsyncpa %s14, 0
    loop: start=0, step=1, limit=4
    $region2: #{tpu_custom_call.1} parent=1 // loop_pre_header
      _
    $region3: #{tpu_custom_call.1} parent=1 // loop_header
      %s17 = sphi 0, %s21
      %p18 = scmp.ge.s32.totalorder %s17, 4
      %s24 = sphi 0, %s36
      %s25 = sphi 0, %s32
      %s26 = sphi 0, %s24
      %s27 = sphi 0, %s25
      %s28 = sphi 0, %s26
      %s29 = sphi 0, %s27
      %s39 = sphi 0, %s41
      %s42 = sphi 0, %s39
      %s43 = sphi 0, %s42
      %s59 = sphi 0, %s43
      %s67 = sphi 0, %s69
      %s70 = sphi 0, %s67
      %s71 = sphi 0, %s70
      %s87 = sphi 0, %s71
      %s95 = sphi 0, %s97
      %s98 = sphi 0, %s95
      %s99 = sphi 0, %s98
      %s115 = sphi 0, %s99
    $region4: #{tpu_custom_call.1} parent=1 // loop_header_branch
      %20 = sbr.rel (%p18) target = $region8
    $region5: #{tpu_custom_call.1} parent=1 // loop_body
      %s22 = ssub.s32 %s17, 1
      %s23 = ssub.s32 %s17, 2
      %s30 = sadd.s32 1, %s25
      %p31 = scmp.ge.s32.totalorder %s30, 1
      %s32 = scalar_select %p31, 0, %s30
      %s33 = sadd.s32 1, %s24
      %s34 = scalar_select %p31, %s33, %s24
      %p35 = scmp.ge.s32.totalorder %s34, 2
      %s36 = scalar_select %p35, 0, %s34
      %s37 = ssub.s32 %s24, %s36
      %p38 = scmp.eq.s32.totalorder %s37, 0
      %s40 = sadd.s32 %s39, 1
      %s41 = scalar_select %p38, %s39, %s40
      %p44 = pneg %p38
      %p45 = scmp.eq.s32.totalorder %s17, 1
      %p46 = por %p44, %p45
      %p47 = scmp.ne.s32.totalorder %s39, %s42
      %p48 = scmp.eq.s32.totalorder %s17, 0
      %p49 = por %p47, %p48
      %p50 = scmp.ne.s32.totalorder %s39, %s42
      %p51 = scmp.eq.s32.totalorder %s22, 1
      %p52 = por %p50, %p51
      %p53 = scmp.ne.s32.totalorder %s42, %s43
      %p54 = scmp.eq.s32.totalorder %s22, 0
      %p55 = por %p53, %p54
      %p56 = scmp.ne.s32.totalorder %s42, %s43
      %p57 = scmp.eq.s32.totalorder %s23, 1
      %p58 = por %p56, %p57
      %p60 = scmp.ne.s32.totalorder %s43, %s59
      %p61 = scmp.eq.s32.totalorder %s23, 0
      %p62 = por %p60, %p61
      %s63 = ssub.s32 %s25, %s32
      %s64 = ssub.s32 %s24, %s36
      %s65 = sor.u32 %s63, %s64
      %p66 = scmp.eq.s32.totalorder %s65, 0
      %s68 = sadd.s32 %s67, 1
      %s69 = scalar_select %p66, %s67, %s68
      %p72 = pneg %p66
      %p73 = scmp.eq.s32.totalorder %s17, 1
      %p74 = por %p72, %p73
      %p75 = scmp.ne.s32.totalorder %s67, %s70
      %p76 = scmp.eq.s32.totalorder %s17, 0
      %p77 = por %p75, %p76
      %p78 = scmp.ne.s32.totalorder %s67, %s70
      %p79 = scmp.eq.s32.totalorder %s22, 1
      %p80 = por %p78, %p79
      %p81 = scmp.ne.s32.totalorder %s70, %s71
      %p82 = scmp.eq.s32.totalorder %s22, 0
      %p83 = por %p81, %p82
      %p84 = scmp.ne.s32.totalorder %s70, %s71
      %p85 = scmp.eq.s32.totalorder %s23, 1
      %p86 = por %p84, %p85
      %p88 = scmp.ne.s32.totalorder %s71, %s87
      %p89 = scmp.eq.s32.totalorder %s23, 0
      %p90 = por %p88, %p89
      %s91 = ssub.s32 %s25, %s32
      %s92 = ssub.s32 %s24, %s36
      %s93 = sor.u32 %s91, %s92
      %p94 = scmp.eq.s32.totalorder %s93, 0
      %s96 = sadd.s32 %s95, 1
      %s97 = scalar_select %p94, %s95, %s96
      %p100 = pneg %p94
      %p101 = scmp.eq.s32.totalorder %s17, 1
      %p102 = por %p100, %p101
      %p103 = scmp.ne.s32.totalorder %s95, %s98
      %p104 = scmp.eq.s32.totalorder %s17, 0
      %p105 = por %p103, %p104
      %p106 = scmp.ne.s32.totalorder %s95, %s98
      %p107 = scmp.eq.s32.totalorder %s22, 1
      %p108 = por %p106, %p107
      %p109 = scmp.ne.s32.totalorder %s98, %s99
      %p110 = scmp.eq.s32.totalorder %s22, 0
      %p111 = por %p109, %p110
      %p112 = scmp.ne.s32.totalorder %s98, %s99
      %p113 = scmp.eq.s32.totalorder %s23, 1
      %p114 = por %p112, %p113
      %p116 = scmp.ne.s32.totalorder %s99, %s115
      %p117 = scmp.eq.s32.totalorder %s23, 0
      %p118 = por %p116, %p117
      %p119 = scmp.le.s32.totalorder 1, %s17
      %p120 = scmp.lt.s32.totalorder %s17, 3
      %p121 = pnand %p119, %p120
      %p122 = pneg %p121
      // Predicated region
      $region9: #{tpu_custom_call.1} parent=5 // pred_check
        _
      $region10: #{tpu_custom_call.1} parent=5 // pred_check_branch
        %124 = sbr.rel (%p121) target = $region12
      $region11: #{tpu_custom_call.1} parent=5 // pred_region
        %s125 = ssub.s32 %s17, 1
      $region12: #{tpu_custom_call.1} parent=5 // pred_fallthru
        _
      %p126 = scmp.lt.s32.totalorder %s17, 2
      // Predicated region
      $region13: #{tpu_custom_call.1} parent=5 // pred_check
        %p127 = pneg %p126
      $region14: #{tpu_custom_call.1} parent=5 // pred_check_branch
        %129 = sbr.rel (%p127) target = $region16
      $region15: #{tpu_custom_call.1} parent=5 // pred_region
        // Predicated region
        $region17: #{tpu_custom_call.1} parent=15 // pred_check
          %p130 = pneg %p49
        $region18: #{tpu_custom_call.1} parent=15 // pred_check_branch
          %132 = sbr.rel (%p130) target = $region20
        $region19: #{tpu_custom_call.1} parent=15 // pred_region
          %s133 = sand.u32 %s39, 1
          %s134 = scalar_lea.sflag [#allocation3], %s133
          %s135 = sand.u32 %s39, 1
          %s136 = smul.addr %s135, 16
          %s137 = scalar_lea.vmem [#allocation2], %s136
          %s139 = ssub.s32 256, 256
          %140 = vsyncadd %s134, %s139
          %s141 = smul.addr %s24, 32
          %s142 = scalar_lea.hbm %s0, %s141
          %s143 = sshll.u32 %s137, 4
          %s144 = int_to_ptr.vmem [resolvable:$true] %s143
          %149 = dma.hbm_to_vmem [thread:$0]  %s142, 256, %s144, %s134, 64, 32, 2
        $region20: #{tpu_custom_call.1} parent=15 // pred_fallthru
          _
        // Predicated region
        $region21: #{tpu_custom_call.1} parent=15 // pred_check
          %p150 = pneg %p77
        $region22: #{tpu_custom_call.1} parent=15 // pred_check_branch
          %152 = sbr.rel (%p150) target = $region24
        $region23: #{tpu_custom_call.1} parent=15 // pred_region
          %s153 = sand.u32 %s67, 1
          %s154 = scalar_lea.sflag [#allocation6], %s153
          %s155 = sand.u32 %s67, 1
          %s156 = smul.addr %s155, 32
          %s157 = scalar_lea.vmem [#allocation5], %s156
          %s159 = ssub.s32 512, 512
          %160 = vsyncadd %s154, %s159
          %s161 = smul.addr %s25, 2
          %s162 = sadd.s32 %s24, %s161
          %s163 = smul.addr %s162, 64
          %s164 = scalar_lea.hbm %s1, %s163
          %s165 = sshll.u32 %s157, 4
          %s166 = int_to_ptr.vmem [resolvable:$true] %s165
          %171 = dma.hbm_to_vmem [thread:$0]  %s164, 512, %s166, %s154, 128, 64, 4
        $region24: #{tpu_custom_call.1} parent=15 // pred_fallthru
          _
      $region16: #{tpu_custom_call.1} parent=5 // pred_fallthru
        _
      %p172 = scmp.le.s32.totalorder 1, %s17
      %p173 = scmp.lt.s32.totalorder %s17, 3
      %p174 = pnand %p172, %p173
      %p175 = pneg %p174
      // Predicated region
      $region25: #{tpu_custom_call.1} parent=5 // pred_check
        _
      $region26: #{tpu_custom_call.1} parent=5 // pred_check_branch
        %177 = sbr.rel (%p174) target = $region28
      $region27: #{tpu_custom_call.1} parent=5 // pred_region
        %s178 = ssub.s32 %s17, 1
        %s179 = sand.u32 %s42, 1
        %s180 = scalar_lea.sflag [#allocation3], %s179
        %s181 = sand.u32 %s42, 1
        %s182 = smul.addr %s181, 16
        %s183 = scalar_lea.vmem [#allocation2], %s182
        // Predicated region
        $region29: #{tpu_custom_call.1} parent=27 // pred_check
          %p184 = pneg %p55
        $region30: #{tpu_custom_call.1} parent=27 // pred_check_branch
          %186 = sbr.rel (%p184) target = $region32
        $region31: #{tpu_custom_call.1} parent=27 // pred_region
          %187 = dma.done %s180, 256
        $region32: #{tpu_custom_call.1} parent=27 // pred_fallthru
          _
        %s188 = sand.u32 %s70, 1
        %s189 = scalar_lea.sflag [#allocation6], %s188
        %s190 = sand.u32 %s70, 1
        %s191 = smul.addr %s190, 32
        %s192 = scalar_lea.vmem [#allocation5], %s191
        // Predicated region
        $region33: #{tpu_custom_call.1} parent=27 // pred_check
          %p193 = pneg %p83
        $region34: #{tpu_custom_call.1} parent=27 // pred_check_branch
          %195 = sbr.rel (%p193) target = $region36
        $region35: #{tpu_custom_call.1} parent=27 // pred_region
          %196 = dma.done %s189, 512
        $region36: #{tpu_custom_call.1} parent=27 // pred_fallthru
          _
        %s197 = sand.u32 %s42, 1
        %s198 = scalar_lea.sflag [#allocation3], %s197
        %s199 = sand.u32 %s42, 1
        %s200 = smul.addr %s199, 16
        %s201 = scalar_lea.vmem [#allocation2], %s200
        %p202 = pneg %p55
        %p203 = pneg %p52
        %s204 = sand.u32 %s70, 1
        %s205 = scalar_lea.sflag [#allocation6], %s204
        %s206 = sand.u32 %s70, 1
        %s207 = smul.addr %s206, 32
        %s208 = scalar_lea.vmem [#allocation5], %s207
        %p209 = pneg %p83
        %p210 = pneg %p80
        %p211 = pneg %p111
        %p212 = pneg %p108
        %s213 = sand.u32 %s98, 1
        %s214 = scalar_lea.sflag [#allocation4], %s213
        %s215 = sand.u32 %s98, 1
        %s216 = smul.addr %s215, 16
        %s217 = scalar_lea.vmem [#allocation7], %s216
        %v218 = vld [vmem:[%s183] sm:$0x3]
        %v221 = vunpack.c.l.s4 1966171168
        %v222 = vunpack.c.0.s8 %v221
        %v223 = vlaneseq
        %v224 = vshrl.u32 %v223, 7
        %v225 = vsub.s32 %v222, %v224
        %v226 = vrot.slane %v218, %v225
        %v227 = vcombine.high %v226, %v226
        %v229 = vunpack.c.l.s4 1966171168
        %v230 = vunpack.c.0.s8 %v229
        %v231 = vlaneseq
        %v232 = vshrl.u32 %v231, 7
        %v233 = vsub.s32 %v230, %v232
        %v234 = vrot.slane %v226, %v233
        %v236 = vunpack.c.l.s4 1966171168
        %v237 = vunpack.c.0.s8 %v236
        %v238 = vlaneseq
        %v239 = vshrl.u32 %v238, 7
        %v240 = vsub.s32 %v237, %v239
        %v241 = vrot.slane %v227, %v240
        %s242 = scalar_lea.vmem %s183, 8 [#allocation2]
        %v243 = vld [vmem:[%s242] sm:$0x3]
        %v246 = vunpack.c.l.s4 1966171168
        %v247 = vunpack.c.0.s8 %v246
        %v248 = vlaneseq
        %v249 = vshrl.u32 %v248, 7
        %v250 = vsub.s32 %v247, %v249
        %v251 = vrot.slane %v243, %v250
        %v252 = vcombine.high %v251, %v251
        %v254 = vunpack.c.l.s4 1966171168
        %v255 = vunpack.c.0.s8 %v254
        %v256 = vlaneseq
        %v257 = vshrl.u32 %v256, 7
        %v258 = vsub.s32 %v255, %v257
        %v259 = vrot.slane %v251, %v258
        %v261 = vunpack.c.l.s4 1966171168
        %v262 = vunpack.c.0.s8 %v261
        %v263 = vlaneseq
        %v264 = vshrl.u32 %v263, 7
        %v265 = vsub.s32 %v262, %v264
        %v266 = vrot.slane %v252, %v265
        %v267 = vld [vmem:[%s192] sm:$0xf]
        %s268 = scalar_lea.vmem %s192, 16 [#allocation5]
        %v269 = vld [vmem:[%s268] sm:$0xf]
        %v270 = vlaneseq
        %v271 = vshrl.u32 %v270, 7
        %v272 = vsub.s32 0, %v271
        %v273 = vrot.slane %v234, %v272
        %v274 = vlaneseq
        %v275 = vshrl.u32 %v274, 7
        %v276 = vsub.s32 0, %v275
        %v277 = vrot.slane %v241, %v276
        %v280 = vmul.f32 %v273, %v267
        %v281 = vmul.f32 %v277, %v267
        %v282 = vadd.f32 %v280, 0.0
        %v283 = vadd.f32 %v281, 0.0
        %v284 = vlaneseq
        %v285 = vshrl.u32 %v284, 7
        %v286 = vsub.s32 0, %v285
        %v287 = vrot.slane %v259, %v286
        %v288 = vlaneseq
        %v289 = vshrl.u32 %v288, 7
        %v290 = vsub.s32 0, %v289
        %v291 = vrot.slane %v266, %v290
        %v294 = vmul.f32 %v287, %v269
        %v295 = vmul.f32 %v291, %v269
        %v296 = vsub.f32 %v282, %v294
        %v297 = vsub.f32 %v283, %v295
        %v298 = vmul.f32 %v273, %v269
        %v299 = vmul.f32 %v277, %v269
        %v300 = vadd.f32 %v298, 0.0
        %v301 = vadd.f32 %v299, 0.0
        %v302 = vmul.f32 %v287, %v267
        %v303 = vmul.f32 %v291, %v267
        %v304 = vadd.f32 %v300, %v302
        %v305 = vadd.f32 %v301, %v303
        %s306 = scalar_lea.vmem %s183, 2 [#allocation2]
        %v307 = vld [vmem:[%s306] sm:$0x3]
        %v310 = vunpack.c.l.s4 1966171168
        %v311 = vunpack.c.0.s8 %v310
        %v312 = vlaneseq
        %v313 = vshrl.u32 %v312, 7
        %v314 = vsub.s32 %v311, %v313
        %v315 = vrot.slane %v307, %v314
        %v316 = vcombine.high %v315, %v315
        %v318 = vunpack.c.l.s4 1966171168
        %v319 = vunpack.c.0.s8 %v318
        %v320 = vlaneseq
        %v321 = vshrl.u32 %v320, 7
        %v322 = vsub.s32 %v319, %v321
        %v323 = vrot.slane %v315, %v322
        %v325 = vunpack.c.l.s4 1966171168
        %v326 = vunpack.c.0.s8 %v325
        %v327 = vlaneseq
        %v328 = vshrl.u32 %v327, 7
        %v329 = vsub.s32 %v326, %v328
        %v330 = vrot.slane %v316, %v329
        %s331 = scalar_lea.vmem %s183, 10 [#allocation2]
        %v332 = vld [vmem:[%s331] sm:$0x3]
        %v335 = vunpack.c.l.s4 1966171168
        %v336 = vunpack.c.0.s8 %v335
        %v337 = vlaneseq
        %v338 = vshrl.u32 %v337, 7
        %v339 = vsub.s32 %v336, %v338
        %v340 = vrot.slane %v332, %v339
        %v341 = vcombine.high %v340, %v340
        %v343 = vunpack.c.l.s4 1966171168
        %v344 = vunpack.c.0.s8 %v343
        %v345 = vlaneseq
        %v346 = vshrl.u32 %v345, 7
        %v347 = vsub.s32 %v344, %v346
        %v348 = vrot.slane %v340, %v347
        %v350 = vunpack.c.l.s4 1966171168
        %v351 = vunpack.c.0.s8 %v350
        %v352 = vlaneseq
        %v353 = vshrl.u32 %v352, 7
        %v354 = vsub.s32 %v351, %v353
        %v355 = vrot.slane %v341, %v354
        %s356 = scalar_lea.vmem %s192, 4 [#allocation5]
        %v357 = vld [vmem:[%s356] sm:$0xf]
        %s358 = scalar_lea.vmem %s192, 20 [#allocation5]
        %v359 = vld [vmem:[%s358] sm:$0xf]
        %v360 = vlaneseq
        %v361 = vshrl.u32 %v360, 7
        %v362 = vsub.s32 0, %v361
        %v363 = vrot.slane %v323, %v362
        %v364 = vlaneseq
        %v365 = vshrl.u32 %v364, 7
        %v366 = vsub.s32 0, %v365
        %v367 = vrot.slane %v330, %v366
        %v370 = vmul.f32 %v363, %v357
        %v371 = vmul.f32 %v367, %v357
        %v372 = vadd.f32 %v296, %v370
        %v373 = vadd.f32 %v297, %v371
        %v374 = vlaneseq
        %v375 = vshrl.u32 %v374, 7
        %v376 = vsub.s32 0, %v375
        %v377 = vrot.slane %v348, %v376
        %v378 = vlaneseq
        %v379 = vshrl.u32 %v378, 7
        %v380 = vsub.s32 0, %v379
        %v381 = vrot.slane %v355, %v380
        %v384 = vmul.f32 %v377, %v359
        %v385 = vmul.f32 %v381, %v359
        %v386 = vsub.f32 %v372, %v384
        %v387 = vsub.f32 %v373, %v385
        %v388 = vmul.f32 %v363, %v359
        %v389 = vmul.f32 %v367, %v359
        %v390 = vadd.f32 %v304, %v388
        %v391 = vadd.f32 %v305, %v389
        %v392 = vmul.f32 %v377, %v357
        %v393 = vmul.f32 %v381, %v357
        %v394 = vadd.f32 %v390, %v392
        %v395 = vadd.f32 %v391, %v393
        %s396 = scalar_lea.vmem %s183, 4 [#allocation2]
        %v397 = vld [vmem:[%s396] sm:$0x3]
        %v400 = vunpack.c.l.s4 1966171168
        %v401 = vunpack.c.0.s8 %v400
        %v402 = vlaneseq
        %v403 = vshrl.u32 %v402, 7
        %v404 = vsub.s32 %v401, %v403
        %v405 = vrot.slane %v397, %v404
        %v406 = vcombine.high %v405, %v405
        %v408 = vunpack.c.l.s4 1966171168
        %v409 = vunpack.c.0.s8 %v408
        %v410 = vlaneseq
        %v411 = vshrl.u32 %v410, 7
        %v412 = vsub.s32 %v409, %v411
        %v413 = vrot.slane %v405, %v412
        %v415 = vunpack.c.l.s4 1966171168
        %v416 = vunpack.c.0.s8 %v415
        %v417 = vlaneseq
        %v418 = vshrl.u32 %v417, 7
        %v419 = vsub.s32 %v416, %v418
        %v420 = vrot.slane %v406, %v419
        %s421 = scalar_lea.vmem %s183, 12 [#allocation2]
        %v422 = vld [vmem:[%s421] sm:$0x3]
        %v425 = vunpack.c.l.s4 1966171168
        %v426 = vunpack.c.0.s8 %v425
        %v427 = vlaneseq
        %v428 = vshrl.u32 %v427, 7
        %v429 = vsub.s32 %v426, %v428
        %v430 = vrot.slane %v422, %v429
        %v431 = vcombine.high %v430, %v430
        %v433 = vunpack.c.l.s4 1966171168
        %v434 = vunpack.c.0.s8 %v433
        %v435 = vlaneseq
        %v436 = vshrl.u32 %v435, 7
        %v437 = vsub.s32 %v434, %v436
        %v438 = vrot.slane %v430, %v437
        %v440 = vunpack.c.l.s4 1966171168
        %v441 = vunpack.c.0.s8 %v440
        %v442 = vlaneseq
        %v443 = vshrl.u32 %v442, 7
        %v444 = vsub.s32 %v441, %v443
        %v445 = vrot.slane %v431, %v444
        %s446 = scalar_lea.vmem %s192, 8 [#allocation5]
        %v447 = vld [vmem:[%s446] sm:$0xf]
        %s448 = scalar_lea.vmem %s192, 24 [#allocation5]
        %v449 = vld [vmem:[%s448] sm:$0xf]
        %v450 = vlaneseq
        %v451 = vshrl.u32 %v450, 7
        %v452 = vsub.s32 0, %v451
        %v453 = vrot.slane %v413, %v452
        %v454 = vlaneseq
        %v455 = vshrl.u32 %v454, 7
        %v456 = vsub.s32 0, %v455
        %v457 = vrot.slane %v420, %v456
        %v460 = vmul.f32 %v453, %v447
        %v461 = vmul.f32 %v457, %v447
        %v462 = vadd.f32 %v386, %v460
        %v463 = vadd.f32 %v387, %v461
        %v464 = vlaneseq
        %v465 = vshrl.u32 %v464, 7
        %v466 = vsub.s32 0, %v465
        %v467 = vrot.slane %v438, %v466
        %v468 = vlaneseq
        %v469 = vshrl.u32 %v468, 7
        %v470 = vsub.s32 0, %v469
        %v471 = vrot.slane %v445, %v470
        %v474 = vmul.f32 %v467, %v449
        %v475 = vmul.f32 %v471, %v449
        %v476 = vsub.f32 %v462, %v474
        %v477 = vsub.f32 %v463, %v475
        %v478 = vmul.f32 %v453, %v449
        %v479 = vmul.f32 %v457, %v449
        %v480 = vadd.f32 %v394, %v478
        %v481 = vadd.f32 %v395, %v479
        %v482 = vmul.f32 %v467, %v447
        %v483 = vmul.f32 %v471, %v447
        %v484 = vadd.f32 %v480, %v482
        %v485 = vadd.f32 %v481, %v483
        %s486 = scalar_lea.vmem %s183, 6 [#allocation2]
        %v487 = vld [vmem:[%s486] sm:$0x3]
        %v490 = vunpack.c.l.s4 1966171168
        %v491 = vunpack.c.0.s8 %v490
        %v492 = vlaneseq
        %v493 = vshrl.u32 %v492, 7
        %v494 = vsub.s32 %v491, %v493
        %v495 = vrot.slane %v487, %v494
        %v496 = vcombine.high %v495, %v495
        %v498 = vunpack.c.l.s4 1966171168
        %v499 = vunpack.c.0.s8 %v498
        %v500 = vlaneseq
        %v501 = vshrl.u32 %v500, 7
        %v502 = vsub.s32 %v499, %v501
        %v503 = vrot.slane %v495, %v502
        %v505 = vunpack.c.l.s4 1966171168
        %v506 = vunpack.c.0.s8 %v505
        %v507 = vlaneseq
        %v508 = vshrl.u32 %v507, 7
        %v509 = vsub.s32 %v506, %v508
        %v510 = vrot.slane %v496, %v509
        %s511 = scalar_lea.vmem %s183, 14 [#allocation2]
        %v512 = vld [vmem:[%s511] sm:$0x3]
        %v515 = vunpack.c.l.s4 1966171168
        %v516 = vunpack.c.0.s8 %v515
        %v517 = vlaneseq
        %v518 = vshrl.u32 %v517, 7
        %v519 = vsub.s32 %v516, %v518
        %v520 = vrot.slane %v512, %v519
        %v521 = vcombine.high %v520, %v520
        %v523 = vunpack.c.l.s4 1966171168
        %v524 = vunpack.c.0.s8 %v523
        %v525 = vlaneseq
        %v526 = vshrl.u32 %v525, 7
        %v527 = vsub.s32 %v524, %v526
        %v528 = vrot.slane %v520, %v527
        %v530 = vunpack.c.l.s4 1966171168
        %v531 = vunpack.c.0.s8 %v530
        %v532 = vlaneseq
        %v533 = vshrl.u32 %v532, 7
        %v534 = vsub.s32 %v531, %v533
        %v535 = vrot.slane %v521, %v534
        %s536 = scalar_lea.vmem %s192, 12 [#allocation5]
        %v537 = vld [vmem:[%s536] sm:$0xf]
        %s538 = scalar_lea.vmem %s192, 28 [#allocation5]
        %v539 = vld [vmem:[%s538] sm:$0xf]
        %v540 = vlaneseq
        %v541 = vshrl.u32 %v540, 7
        %v542 = vsub.s32 0, %v541
        %v543 = vrot.slane %v503, %v542
        %v544 = vlaneseq
        %v545 = vshrl.u32 %v544, 7
        %v546 = vsub.s32 0, %v545
        %v547 = vrot.slane %v510, %v546
        %v550 = vmul.f32 %v543, %v537
        %v551 = vmul.f32 %v547, %v537
        %v552 = vadd.f32 %v476, %v550
        %v553 = vadd.f32 %v477, %v551
        %v554 = vlaneseq
        %v555 = vshrl.u32 %v554, 7
        %v556 = vsub.s32 0, %v555
        %v557 = vrot.slane %v528, %v556
        %v558 = vlaneseq
        %v559 = vshrl.u32 %v558, 7
        %v560 = vsub.s32 0, %v559
        %v561 = vrot.slane %v535, %v560
        %v564 = vmul.f32 %v557, %v539
        %v565 = vmul.f32 %v561, %v539
        %v566 = vsub.f32 %v552, %v564
        %v567 = vsub.f32 %v553, %v565
        %v568 = vmul.f32 %v543, %v539
        %v569 = vmul.f32 %v547, %v539
        %v570 = vadd.f32 %v484, %v568
        %v571 = vadd.f32 %v485, %v569
        %v572 = vmul.f32 %v557, %v537
        %v573 = vmul.f32 %v561, %v537
        %v574 = vadd.f32 %v570, %v572
        %v575 = vadd.f32 %v571, %v573
        %576 = vst [vmem:[%s217] sm:$0xf] %v566
        %577 = vst [vmem:[%s217 + $0x4] sm:$0xf] %v567
        %s578 = scalar_lea.vmem %s217, 8 [#allocation7]
        %579 = vst [vmem:[%s578] sm:$0xf] %v574
        %580 = vst [vmem:[%s578 + $0x4] sm:$0xf] %v575
        %s581 = sand.u32 %s98, 1
        %s582 = scalar_lea.sflag [#allocation4], %s581
        %s583 = sand.u32 %s98, 1
        %s584 = smul.addr %s583, 16
        %s585 = scalar_lea.vmem [#allocation7], %s584
        // Predicated region
        $region37: #{tpu_custom_call.1} parent=27 // pred_check
          %p586 = pneg %p108
        $region38: #{tpu_custom_call.1} parent=27 // pred_check_branch
          %588 = sbr.rel (%p586) target = $region40
        $region39: #{tpu_custom_call.1} parent=27 // pred_region
          %s590 = ssub.s32 256, 256
          %591 = vsyncadd %s582, %s590
          %s592 = smul.addr %s27, 2
          %s593 = sadd.s32 %s26, %s592
          %s594 = smul.addr %s593, 64
          %s595 = scalar_lea.hbm %s2, %s594
          %s596 = sshll.u32 %s585, 4
          %s597 = int_to_ptr.vmem [resolvable:$true] %s596
          %602 = dma.vmem_to_hbm [thread:$0]  %s597, 256, %s595, %s582, 64, 128, 4
        $region40: #{tpu_custom_call.1} parent=27 // pred_fallthru
          _
      $region28: #{tpu_custom_call.1} parent=5 // pred_fallthru
        _
      %p603 = scmp.le.s32.totalorder 2, %s17
      // Predicated region
      $region41: #{tpu_custom_call.1} parent=5 // pred_check
        %p604 = pneg %p603
      $region42: #{tpu_custom_call.1} parent=5 // pred_check_branch
        %606 = sbr.rel (%p604) target = $region44
      $region43: #{tpu_custom_call.1} parent=5 // pred_region
        %s607 = ssub.s32 %s17, 2
        // Predicated region
        $region45: #{tpu_custom_call.1} parent=43 // pred_check
          %p608 = pneg %p114
        $region46: #{tpu_custom_call.1} parent=43 // pred_check_branch
          %610 = sbr.rel (%p608) target = $region48
        $region47: #{tpu_custom_call.1} parent=43 // pred_region
          %s611 = sand.u32 %s99, 1
          %s612 = scalar_lea.sflag [#allocation4], %s611
          %s613 = sand.u32 %s99, 1
          %s614 = smul.addr %s613, 16
          %s615 = scalar_lea.vmem [#allocation7], %s614
          %616 = dma.done %s612, 256
        $region48: #{tpu_custom_call.1} parent=43 // pred_fallthru
          _
      $region44: #{tpu_custom_call.1} parent=5 // pred_fallthru
        _
    $region6: #{tpu_custom_call.1} parent=1 // loop_footer
      %s21 = sadd.s32 1, %s17
    $region7: #{tpu_custom_call.1} parent=1 // loop_footer_branch
      %16 = sbr.rel target = $region3
    $region8: #{tpu_custom_call.1} parent=1 // loop_exit
      _
    %617 = vsyncpa [#allocation3], 1
    %s618 = scalar_lea.sflag [#allocation3], 1
    %619 = vsyncpa %s618, 1
    %620 = vsyncpa [#allocation6], 1
    %s621 = scalar_lea.sflag [#allocation6], 1
    %622 = vsyncpa %s621, 1
    %623 = vsyncpa [#allocation4], 1
    %s624 = scalar_lea.sflag [#allocation4], 1
    %625 = vsyncpa %s624, 1

</llo_original>
